<compile_context>
chip_gen: v5e
topology: v5e:2x2
jax: 0.10.0
libtpu: 0.0.40
codegen_flags: <defaults>
</compile_context>

<pallas_src>
import functools

import jax
import jax.numpy as jnp
from jax.experimental import pallas as pl
from jax.experimental.pallas import tpu as pltpu


def _round_up(x, m):
    return (x + m - 1) // m * m


def _divisors(x):
    return [d for d in range(1, x + 1) if x % d == 0]


def _vmem_budget():
    """(tile-picker budget, vmem_limit_bytes) derived from physical VMEM."""
    try:
        cap = int(pltpu.get_tpu_info().vmem_capacity_bytes)
    except Exception:
        cap = 64 * 1024 * 1024          # conservative fallback (v7x-sized)
    budget = cap // 2                   # 64 MiB on v5e/v6e, 32 MiB on v7x
    limit = min(cap * 3 // 4, cap - (8 << 20))
    return budget, limit


def _pick_tile_rows(ho, wo8, k3c, cp_tile, x_itemsize, out_itemsize,
                    w_resident_bytes, budget, tile_rows):
    """Largest divisor of Ho whose working set fits the VMEM budget."""
    if tile_rows is not None:
        if ho % tile_rows != 0:
            raise ValueError("tile_rows must divide the output height")
        return int(tile_rows)

    lane_k = _round_up(k3c, 128)        # lane padding of the packed input

    def vmem_bytes(t):
        x_blk = (2 * t + 1) * wo8 * lane_k * x_itemsize
        o_blk = t * wo8 * cp_tile * out_itemsize
        return w_resident_bytes + 2 * (x_blk + o_blk)   # x/out double-buffered

    fitting = [t for t in _divisors(ho) if vmem_bytes(t) <= budget]
    return max(fitting) if fitting else 1


def _pick_chunk(t_oh, wo8, cp_tile):
    """Rows per in-kernel M-chunk: keep the f32 accumulator <= ~128 KiB."""
    max_m = max(1, (128 * 1024) // (cp_tile * 4))
    max_rows = max(1, max_m // wo8)
    for ch in range(min(t_oh, max_rows), 0, -1):
        if t_oh % ch == 0:
            return ch
    return 1


def _conv3x3s2_kernel(x_ref, w_ref, b_ref, o_ref, *, chunk):
    """One (row-tile, batch, cout-tile) step of the stride-2 3x3 conv.

    x_ref: (2T+1, Wo8, 3C)  kw-folded, row-parity-packed padded input:
             rows [0 : T+1]     = even padded rows 2*i   (i = local out row)
             rows [T+1 : 2T+1]  = odd  padded rows 2*i+1
    w_ref: (3, 3C, CPt)     kh-major weights, inner index = kw*C + ci
    b_ref: (1, CPt)
    o_ref: (T, Wo8, CPt)    lane-dense (CPt is a multiple of 128)
    """
    t_rows, wo8, cp = o_ref.shape
    k3c = x_ref.shape[-1]
    m = chunk * wo8
    n_chunks = t_rows // chunk

    bias_row = b_ref[...].astype(jnp.float32)           # (1, CPt)

    def compute_chunk(m0):
        # All slices are along the leading (untiled) axis; wo8 % 8 == 0 makes
        # the reshape to the GEMM M dim a free re-view (no relayout).
        t0 = x_ref[pl.ds(m0, chunk)].reshape(m, k3c)                  # kh = 0
        t1 = x_ref[pl.ds(t_rows + 1 + m0, chunk)].reshape(m, k3c)     # kh = 1
        t2 = x_ref[pl.ds(m0 + 1, chunk)].reshape(m, k3c)              # kh = 2
        acc = jnp.broadcast_to(bias_row, (m, cp))        # bias-initialized acc
        acc = acc + jnp.dot(t0, w_ref[0], preferred_element_type=jnp.float32)
        acc = acc + jnp.dot(t1, w_ref[1], preferred_element_type=jnp.float32)
        acc = acc + jnp.dot(t2, w_ref[2], preferred_element_type=jnp.float32)
        o_ref[pl.ds(m0, chunk)] = acc.reshape(chunk, wo8, cp).astype(o_ref.dtype)

    if n_chunks == 1:
        compute_chunk(0)
    else:
        def body(ci, carry):
            compute_chunk(pl.multiple_of(ci * chunk, chunk))
            return carry
        jax.lax.fori_loop(0, n_chunks, body, 0)


@functools.partial(jax.jit, static_argnames=("tile_rows", "compute_dtype"))
def downsample_forward(x_nchw, weight, bias, tile_rows=None,
                       compute_dtype=jnp.float32):
    """Equivalent of nn.Conv2d(C, 2C, kernel_size=3, stride=2, padding=1)(x)."""
    n, c, h, w = x_nchw.shape
    c_out = weight.shape[0]
    out_dtype = x_nchw.dtype
    cdt = jnp.dtype(compute_dtype)

    ho, wo = (h + 1) // 2, (w + 1) // 2
    wo8 = _round_up(wo, 8)              # sublane-aligned output width
    cp = _round_up(c_out, 128)          # lane-aligned output channels
    k3c = 3 * c                         # contraction dim (kw folded into C)

    # Output-channel tiling: keeps weight residency + accumulator small when
    # C_out is large (critical on v7x's 64 MiB VMEM).
    cp_tile = cp
    if cp > 512:
        for cand in (512, 384, 256, 128):
            if cp % cand == 0:
                cp_tile = cand
                break
    n_cp = cp // cp_tile

    budget, vmem_limit = _vmem_budget()

    w_block_bytes = 3 * _round_up(k3c, 8) * cp_tile * cdt.itemsize
    # Weight index_map is constant only when there is a single C_out tile;
    # single-buffer it then (the demo shapes never hit this path).
    single_buffer_w = (n_cp == 1) and (w_block_bytes > (4 << 20))
    w_bufs = 1 if single_buffer_w else 2
    w_resident = w_bufs * w_block_bytes + 2 * cp_tile * 4   # + bias

    t_oh = _pick_tile_rows(ho, wo8, k3c, cp_tile, cdt.itemsize,
                           jnp.dtype(out_dtype).itemsize, w_resident,
                           budget, tile_rows)
    n_t = ho // t_oh
    chunk = _pick_chunk(t_oh, wo8, cp_tile)

    # ---- input repack (single pad/slice/concat chain) -----------------------
    # padded rows needed: 0 .. 2*Ho ; padded cols needed: 0 .. 2*Wo8
    x = jnp.transpose(x_nchw, (0, 2, 3, 1)).astype(cdt)                # NHWC
    xp = jnp.pad(x, ((0, 0), (1, 2 * ho - h), (1, 2 * wo8 - w), (0, 0)))
    # fold kw into channels: packed[..., j, kw*C + ci] = xp[..., 2j + kw, ci]
    xc = jnp.concatenate(
        [xp[:, :, 0:2 * wo8:2, :],
         xp[:, :, 1:2 * wo8:2, :],
         xp[:, :, 2:2 * wo8 + 1:2, :]], axis=-1)       # (N, 2Ho+1, Wo8, 3C)
    x_even = xc[:, 0::2]                               # (N, Ho+1, Wo8, 3C)
    x_odd = xc[:, 1::2]                                # (N, Ho,   Wo8, 3C)
    if n_t == 1:
        x_tiles = jnp.concatenate([x_even, x_odd], axis=1)[:, None]
    else:
        # one-even-row halo per row tile
        ridx_e = t_oh * jnp.arange(n_t)[:, None] + jnp.arange(t_oh + 1)[None, :]
        ridx_o = t_oh * jnp.arange(n_t)[:, None] + jnp.arange(t_oh)[None, :]
        x_tiles = jnp.concatenate([x_even[:, ridx_e], x_odd[:, ridx_o]], axis=2)
    # x_tiles: (N, n_t, 2T+1, Wo8, 3C); rows [0:T+1] even, [T+1:2T+1] odd.

    # PyTorch weight (C_out, C_in, 3, 3) -> (kh, kw*C_in, C_out padded to Cp).
    w_mat = jnp.transpose(weight, (2, 3, 1, 0)).reshape(3, k3c, c_out)
    w_mat = jnp.pad(w_mat, ((0, 0), (0, 0), (0, cp - c_out))).astype(cdt)
    b_mat = jnp.pad(bias, (0, cp - c_out)).astype(jnp.float32).reshape(1, cp)

    # Grid: larger of (row-tile, batch) axis first (megacore split with N==1);
    # C_out tiles innermost so the x block isn't refetched when only the
    # output-channel tile changes.
    if n_t >= n:
        grid = (n_t, n, n_cp)

        def _bt(g0, g1):
            return g1, g0
    else:
        grid = (n, n_t, n_cp)

        def _bt(g0, g1):
            return g0, g1

    def x_map(g0, g1, k):
        b, t = _bt(g0, g1)
        return (b, t, 0, 0, 0)

    def w_map(g0, g1, k):
        return (0, 0, k)

    def bias_map(g0, g1, k):
        return (0, k)

    def o_map(g0, g1, k):
        b, t = _bt(g0, g1)
        return (b, t, 0, k)

    w_spec_kwargs = {"pipeline_mode": pl.Buffered(1)} if single_buffer_w else {}

    out = pl.pallas_call(
        functools.partial(_conv3x3s2_kernel, chunk=chunk),
        out_shape=jax.ShapeDtypeStruct((n, ho, wo8, cp), out_dtype),
        grid_spec=pltpu.PrefetchScalarGridSpec(
            num_scalar_prefetch=0,
            grid=grid,
            in_specs=[
                pl.BlockSpec((None, None, 2 * t_oh + 1, wo8, k3c), x_map),
                pl.BlockSpec((3, k3c, cp_tile), w_map, **w_spec_kwargs),
                pl.BlockSpec((1, cp_tile), bias_map, **w_spec_kwargs),
            ],
            out_specs=pl.BlockSpec((None, t_oh, wo8, cp_tile), o_map),
        ),
        compiler_params=pltpu.CompilerParams(
            dimension_semantics=("parallel", "parallel", "parallel"),
            vmem_limit_bytes=int(vmem_limit),
        ),
    )(x_tiles, w_mat, b_mat)

    # (N, Ho, Wo8, Cp) -> drop width/channel padding -> NCHW.
    out = out[:, :, :wo, :c_out]
    return jnp.transpose(out, (0, 3, 1, 2))


if __name__ == "__main__":
    def conv_ref(x, weight, bias):
        y = jax.lax.conv_general_dilated(
            x, weight, window_strides=(2, 2), padding=((1, 1), (1, 1)),
            dimension_numbers=("NCHW", "OIHW", "NCHW"))
        return y + bias[None, :, None, None]

    def make_params(key, c_in):
        kw_, kb = jax.random.split(key)
        c_out = 2 * c_in
        bound = 1.0 / ((c_in * 9) ** 0.5)
        weight = jax.random.uniform(kw_, (c_out, c_in, 3, 3), jnp.float32,
                                    -bound, bound)
        b = jax.random.uniform(kb, (c_out,), jnp.float32, -bound, bound)
        return weight, b

    key = jax.random.PRNGKey(0)
    k1, k2, k3, k4 = jax.random.split(key, 4)

    # Case 1: canonical small shape (matches the module defaults), f32.
    x1 = jax.random.normal(k1, (2, 4, 16, 16), jnp.float32)
    w1, b1 = make_params(k2, 4)
    ref1 = conv_ref(x1, w1, b1)
    y1 = jax.block_until_ready(downsample_forward(x1, w1, b1))
    assert y1.shape == (2, 8, 8, 8), y1.shape
    assert jnp.allclose(y1, ref1, atol=1e-4, rtol=1e-4), \
        float(jnp.max(jnp.abs(y1 - ref1)))

    # Case 2: multi-row-tile path (halo duplication across tiles).
    y2 = jax.block_until_ready(downsample_forward(x1, w1, b1, tile_rows=4))
    assert jnp.allclose(y2, ref1, atol=1e-4, rtol=1e-4), \
        float(jnp.max(jnp.abs(y2 - ref1)))

    # Case 3: larger spatial extent -> exercises the in-kernel M-chunk loop.
    x3 = jax.random.normal(k3, (1, 4, 64, 64), jnp.float32)
    ref3 = conv_ref(x3, w1, b1)
    y3 = jax.block_until_ready(downsample_forward(x3, w1, b1))
    assert jnp.allclose(y3, ref3, atol=1e-4, rtol=1e-4), \
        float(jnp.max(jnp.abs(y3 - ref3)))

    # Case 4: odd spatial size + non-power-of-two channels.
    x4 = jax.random.normal(k4, (2, 3, 15, 15), jnp.float32)
    w4, b4 = make_params(k2, 3)
    ref4 = conv_ref(x4, w4, b4)
    y4 = jax.block_until_ready(downsample_forward(x4, w4, b4))
    assert y4.shape == (2, 6, 8, 8), y4.shape
    assert jnp.allclose(y4, ref4, atol=1e-4, rtol=1e-4), \
        float(jnp.max(jnp.abs(y4 - ref4)))

    # Case 5: bf16 operand path (f32 accumulation) vs bf16-quantized reference.
    ref5 = conv_ref(x1.astype(jnp.bfloat16).astype(jnp.float32),
                    w1.astype(jnp.bfloat16).astype(jnp.float32), b1)
    y5 = jax.block_until_ready(
        downsample_forward(x1, w1, b1, compute_dtype=jnp.bfloat16))
    assert jnp.allclose(y5, ref5, atol=1e-3, rtol=1e-3), \
        float(jnp.max(jnp.abs(y5 - ref5)))

    print("KERNEL_OK")
</pallas_src>

<mosaic_0001>
module attributes {stable_mosaic.version = 11 : i64} {
  func.func @_conv3x3s2_kernel(%arg0: i32, %arg1: i32, %arg2: i32, %arg3: memref<1x1x17x8x12xf32, #tpu.memory_space<vmem>>, %arg4: memref<3x12x128xf32, #tpu.memory_space<vmem>>, %arg5: memref<1x128xf32, #tpu.memory_space<vmem>>, %arg6: memref<1x8x8x128xf32, #tpu.memory_space<vmem>>) attributes {dimension_semantics = [#tpu.dimension_semantics<parallel>, #tpu.dimension_semantics<parallel>, #tpu.dimension_semantics<parallel>], iteration_bounds = array<i64: 2, 1, 1>, scalar_prefetch = 0 : i64, scratch_operands = 0 : i64, tpu.core_type = #tpu.core_type<tc>, window_params = [{transform_indices = @transform_0, window_bounds = array<i64: 1, 1, 17, 8, 12>}, {transform_indices = @transform_1, window_bounds = array<i64: 3, 12, 128>}, {transform_indices = @transform_2, window_bounds = array<i64: 1, 128>}, {transform_indices = @transform_3, window_bounds = array<i64: 1, 8, 8, 128>}]} {
    %c0 = arith.constant 0 : index
    %c0_0 = arith.constant 0 : index
    %0 = vector.load %arg5[%c0, %c0_0] : memref<1x128xf32, #tpu.memory_space<vmem>>, vector<1x128xf32>
    %c0_1 = arith.constant 0 : index
    %c0_2 = arith.constant 0 : index
    %c0_3 = arith.constant 0 : index
    %c0_4 = arith.constant 0 : index
    %c0_5 = arith.constant 0 : index
    %1 = vector.load %arg3[%c0_1, %c0_2, %c0_3, %c0_4, %c0_5] : memref<1x1x17x8x12xf32, #tpu.memory_space<vmem>>, vector<1x1x8x8x12xf32>
    %2 = vector.shape_cast %1 : vector<1x1x8x8x12xf32> to vector<8x8x12xf32>
    %3 = vector.shape_cast %2 : vector<8x8x12xf32> to vector<64x12xf32>
    %c0_6 = arith.constant 0 : index
    %c0_7 = arith.constant 0 : index
    %c9 = arith.constant 9 : index
    %c0_8 = arith.constant 0 : index
    %c0_9 = arith.constant 0 : index
    %4 = vector.load %arg3[%c0_6, %c0_7, %c9, %c0_8, %c0_9] : memref<1x1x17x8x12xf32, #tpu.memory_space<vmem>>, vector<1x1x8x8x12xf32>
    %5 = vector.shape_cast %4 : vector<1x1x8x8x12xf32> to vector<8x8x12xf32>
    %6 = vector.shape_cast %5 : vector<8x8x12xf32> to vector<64x12xf32>
    %c0_10 = arith.constant 0 : index
    %c0_11 = arith.constant 0 : index
    %c1 = arith.constant 1 : index
    %c0_12 = arith.constant 0 : index
    %c0_13 = arith.constant 0 : index
    %7 = vector.load %arg3[%c0_10, %c0_11, %c1, %c0_12, %c0_13] : memref<1x1x17x8x12xf32, #tpu.memory_space<vmem>>, vector<1x1x8x8x12xf32>
    %8 = vector.shape_cast %7 : vector<1x1x8x8x12xf32> to vector<8x8x12xf32>
    %9 = vector.shape_cast %8 : vector<8x8x12xf32> to vector<64x12xf32>
    %10 = vector.shape_cast %0 : vector<1x128xf32> to vector<1x128xf32>
    %11 = vector.broadcast %10 : vector<1x128xf32> to vector<64x128xf32>
    %c0_14 = arith.constant 0 : index
    %c0_15 = arith.constant 0 : index
    %c0_16 = arith.constant 0 : index
    %12 = vector.load %arg4[%c0_14, %c0_15, %c0_16] : memref<3x12x128xf32, #tpu.memory_space<vmem>>, vector<1x12x128xf32>
    %13 = vector.shape_cast %12 : vector<1x12x128xf32> to vector<12x128xf32>
    %cst = arith.constant dense<0.000000e+00> : vector<64x128xf32>
    %14 = tpu.matmul %3, %13, %cst {dimension_numbers = #tpu.dot_dimension_numbers<[1], [0], [0], [1], [0, 0, 1, 1], [], []>} : vector<64x12xf32>, vector<12x128xf32>, vector<64x128xf32> -> vector<64x128xf32>
    %15 = arith.addf %11, %14 : vector<64x128xf32>
    %c1_17 = arith.constant 1 : index
    %c0_18 = arith.constant 0 : index
    %c0_19 = arith.constant 0 : index
    %16 = vector.load %arg4[%c1_17, %c0_18, %c0_19] : memref<3x12x128xf32, #tpu.memory_space<vmem>>, vector<1x12x128xf32>
    %17 = vector.shape_cast %16 : vector<1x12x128xf32> to vector<12x128xf32>
    %cst_20 = arith.constant dense<0.000000e+00> : vector<64x128xf32>
    %18 = tpu.matmul %6, %17, %cst_20 {dimension_numbers = #tpu.dot_dimension_numbers<[1], [0], [0], [1], [0, 0, 1, 1], [], []>} : vector<64x12xf32>, vector<12x128xf32>, vector<64x128xf32> -> vector<64x128xf32>
    %19 = arith.addf %15, %18 : vector<64x128xf32>
    %c2 = arith.constant 2 : index
    %c0_21 = arith.constant 0 : index
    %c0_22 = arith.constant 0 : index
    %20 = vector.load %arg4[%c2, %c0_21, %c0_22] : memref<3x12x128xf32, #tpu.memory_space<vmem>>, vector<1x12x128xf32>
    %21 = vector.shape_cast %20 : vector<1x12x128xf32> to vector<12x128xf32>
    %cst_23 = arith.constant dense<0.000000e+00> : vector<64x128xf32>
    %22 = tpu.matmul %9, %21, %cst_23 {dimension_numbers = #tpu.dot_dimension_numbers<[1], [0], [0], [1], [0, 0, 1, 1], [], []>} : vector<64x12xf32>, vector<12x128xf32>, vector<64x128xf32> -> vector<64x128xf32>
    %23 = arith.addf %19, %22 : vector<64x128xf32>
    %24 = vector.shape_cast %23 : vector<64x128xf32> to vector<8x8x128xf32>
    %c0_24 = arith.constant 0 : index
    %c0_25 = arith.constant 0 : index
    %c0_26 = arith.constant 0 : index
    %c0_27 = arith.constant 0 : index
    %25 = vector.load %arg6[%c0_24, %c0_25, %c0_26, %c0_27] : memref<1x8x8x128xf32, #tpu.memory_space<vmem>>, vector<1x8x8x128xf32>
    %26 = vector.shape_cast %25 : vector<1x8x8x128xf32> to vector<8x8x128xf32>
    %27 = vector.shape_cast %24 : vector<8x8x128xf32> to vector<1x8x8x128xf32>
    tpu.vector_store %arg6[%c0_24, %c0_25, %c0_26, %c0_27], %27 {strides = array<i32>} : memref<1x8x8x128xf32, #tpu.memory_space<vmem>>, vector<1x8x8x128xf32>,
    return
  }
  func.func @transform_0(%arg0: i32, %arg1: i32, %arg2: i32) -> (i32, i32, i32, i32, i32) {
    %c0_i32 = arith.constant 0 : i32
    %c0_i32_0 = arith.constant 0 : i32
    %c0_i32_1 = arith.constant 0 : i32
    %c0_i32_2 = arith.constant 0 : i32
    return %arg0, %arg1, %c0_i32, %c0_i32_0, %c0_i32_1 : i32, i32, i32, i32, i32
  }
  func.func @transform_1(%arg0: i32, %arg1: i32, %arg2: i32) -> (i32, i32, i32) {
    %c0_i32 = arith.constant 0 : i32
    %c0_i32_0 = arith.constant 0 : i32
    %c0_i32_1 = arith.constant 0 : i32
    return %c0_i32, %c0_i32_0, %arg2 : i32, i32, i32
  }
  func.func @transform_2(%arg0: i32, %arg1: i32, %arg2: i32) -> (i32, i32) {
    %c0_i32 = arith.constant 0 : i32
    %c0_i32_0 = arith.constant 0 : i32
    return %c0_i32, %arg2 : i32, i32
  }
  func.func @transform_3(%arg0: i32, %arg1: i32, %arg2: i32) -> (i32, i32, i32, i32) {
    %c0_i32 = arith.constant 0 : i32
    %c0_i32_0 = arith.constant 0 : i32
    return %arg0, %arg1, %c0_i32, %arg2 : i32, i32, i32, i32
  }
}

</mosaic_0001>

<llo_original>
// kernel: downsample_forward.1
$region0: #{downsample_forward.1}
  #allocation0 [shape = 'u32[]', space=smem, size = 0x4, offset = 0x4, fixed_abs, tag = 'smem constant byte address 0x4 - core index']
  #allocation1 [shape = 'u32[72,128]{1,0:T(1,128)}', space=vmem, size = 0x9000, scoped, tag = 'internal scratch']
  %s0 = inlined_call_operand.vmem [shape: f32[2,1,17,8,12], index: 0, kind: input, shape index: {}]
  %s1 = inlined_call_operand.vmem [shape: f32[3,12,128], index: 1, kind: input, shape index: {}]
  %s2 = inlined_call_operand.vmem [shape: f32[1,128], index: 2, kind: input, shape index: {}]
  %s3 = inlined_call_operand.vmem [shape: f32[2,8,8,128], index: 3, kind: output, shape index: {}]
  %s4 = sld [smem:[#allocation0]]
  $region45: #{downsample_forward.1} parent=0
    _
  %s6 = ssub.s32 1, %s4
  %s7 = scalar_select 0, %s6, %s4
  loop: start=0, step=1, limit=4
  $region2: #{downsample_forward.1} parent=0 // loop_pre_header
    _
  $region3: #{downsample_forward.1} parent=0 // loop_header
    %s9 = sphi 0, %s13
    %p10 = scmp.ge.s32.totalorder %s9, 4
    %s16 = sphi 0, %s35
    %s17 = sphi 0, %s31
    %s18 = sphi 0, %s27
    %s19 = sphi 0, %s16
    %s20 = sphi 0, %s17
    %s21 = sphi 0, %s18
    %s22 = sphi 0, %s19
    %s23 = sphi 0, %s20
    %s24 = sphi 0, %s21
    %s40 = sphi 0, %s42
    %s43 = sphi 0, %s40
    %s44 = sphi 0, %s43
    %s60 = sphi 0, %s44
    %s66 = sphi 0, %s68
    %s69 = sphi 0, %s66
    %s70 = sphi 0, %s69
    %s86 = sphi 0, %s70
    %s92 = sphi 0, %s94
    %s95 = sphi 0, %s92
    %s96 = sphi 0, %s95
    %s112 = sphi 0, %s96
    %s122 = sphi 0, %s124
    %s125 = sphi 0, %s122
    %s126 = sphi 0, %s125
    %s142 = sphi 0, %s126
  $region4: #{downsample_forward.1} parent=0 // loop_header_branch
    %12 = sbr.rel (%p10) target = $region8
  $region5: #{downsample_forward.1} parent=0 // loop_body
    %s14 = ssub.s32 %s9, 1
    %s15 = ssub.s32 %s9, 2
    %s25 = sadd.s32 1, %s18
    %p26 = scmp.ge.s32.totalorder %s25, 1
    %s27 = scalar_select %p26, 0, %s25
    %s28 = sadd.s32 1, %s17
    %s29 = scalar_select %p26, %s28, %s17
    %p30 = scmp.ge.s32.totalorder %s29, 1
    %s31 = scalar_select %p30, 0, %s29
    %s32 = sadd.s32 1, %s16
    %s33 = scalar_select %p30, %s32, %s16
    %p34 = scmp.ge.s32.totalorder %s33, 2
    %s35 = scalar_select %p34, 0, %s33
    %s36 = ssub.s32 %s16, %s35
    %s37 = ssub.s32 %s17, %s31
    %s38 = sor.u32 %s36, %s37
    %p39 = scmp.eq.s32.totalorder %s38, 0
    %s41 = sadd.s32 %s40, 1
    %s42 = scalar_select %p39, %s40, %s41
    %p45 = pneg %p39
    %p46 = scmp.eq.s32.totalorder %s9, 1
    %p47 = por %p45, %p46
    %p48 = scmp.ne.s32.totalorder %s40, %s43
    %p49 = scmp.eq.s32.totalorder %s9, 0
    %p50 = por %p48, %p49
    %p51 = scmp.ne.s32.totalorder %s40, %s43
    %p52 = scmp.eq.s32.totalorder %s14, 1
    %p53 = por %p51, %p52
    %p54 = scmp.ne.s32.totalorder %s43, %s44
    %p55 = scmp.eq.s32.totalorder %s14, 0
    %p56 = por %p54, %p55
    %p57 = scmp.ne.s32.totalorder %s43, %s44
    %p58 = scmp.eq.s32.totalorder %s15, 1
    %p59 = por %p57, %p58
    %p61 = scmp.ne.s32.totalorder %s44, %s60
    %p62 = scmp.eq.s32.totalorder %s15, 0
    %p63 = por %p61, %p62
    %s64 = ssub.s32 %s18, %s27
    %p65 = scmp.eq.s32.totalorder %s64, 0
    %s67 = sadd.s32 %s66, 1
    %s68 = scalar_select %p65, %s66, %s67
    %p71 = pneg %p65
    %p72 = scmp.eq.s32.totalorder %s9, 1
    %p73 = por %p71, %p72
    %p74 = scmp.ne.s32.totalorder %s66, %s69
    %p75 = scmp.eq.s32.totalorder %s9, 0
    %p76 = por %p74, %p75
    %p77 = scmp.ne.s32.totalorder %s66, %s69
    %p78 = scmp.eq.s32.totalorder %s14, 1
    %p79 = por %p77, %p78
    %p80 = scmp.ne.s32.totalorder %s69, %s70
    %p81 = scmp.eq.s32.totalorder %s14, 0
    %p82 = por %p80, %p81
    %p83 = scmp.ne.s32.totalorder %s69, %s70
    %p84 = scmp.eq.s32.totalorder %s15, 1
    %p85 = por %p83, %p84
    %p87 = scmp.ne.s32.totalorder %s70, %s86
    %p88 = scmp.eq.s32.totalorder %s15, 0
    %p89 = por %p87, %p88
    %s90 = ssub.s32 %s18, %s27
    %p91 = scmp.eq.s32.totalorder %s90, 0
    %s93 = sadd.s32 %s92, 1
    %s94 = scalar_select %p91, %s92, %s93
    %p97 = pneg %p91
    %p98 = scmp.eq.s32.totalorder %s9, 1
    %p99 = por %p97, %p98
    %p100 = scmp.ne.s32.totalorder %s92, %s95
    %p101 = scmp.eq.s32.totalorder %s9, 0
    %p102 = por %p100, %p101
    %p103 = scmp.ne.s32.totalorder %s92, %s95
    %p104 = scmp.eq.s32.totalorder %s14, 1
    %p105 = por %p103, %p104
    %p106 = scmp.ne.s32.totalorder %s95, %s96
    %p107 = scmp.eq.s32.totalorder %s14, 0
    %p108 = por %p106, %p107
    %p109 = scmp.ne.s32.totalorder %s95, %s96
    %p110 = scmp.eq.s32.totalorder %s15, 1
    %p111 = por %p109, %p110
    %p113 = scmp.ne.s32.totalorder %s96, %s112
    %p114 = scmp.eq.s32.totalorder %s15, 0
    %p115 = por %p113, %p114
    %s116 = ssub.s32 %s16, %s35
    %s117 = ssub.s32 %s17, %s31
    %s118 = sor.u32 %s116, %s117
    %s119 = ssub.s32 %s18, %s27
    %s120 = sor.u32 %s118, %s119
    %p121 = scmp.eq.s32.totalorder %s120, 0
    %s123 = sadd.s32 %s122, 1
    %s124 = scalar_select %p121, %s122, %s123
    %p127 = pneg %p121
    %p128 = scmp.eq.s32.totalorder %s9, 1
    %p129 = por %p127, %p128
    %p130 = scmp.ne.s32.totalorder %s122, %s125
    %p131 = scmp.eq.s32.totalorder %s9, 0
    %p132 = por %p130, %p131
    %p133 = scmp.ne.s32.totalorder %s122, %s125
    %p134 = scmp.eq.s32.totalorder %s14, 1
    %p135 = por %p133, %p134
    %p136 = scmp.ne.s32.totalorder %s125, %s126
    %p137 = scmp.eq.s32.totalorder %s14, 0
    %p138 = por %p136, %p137
    %p139 = scmp.ne.s32.totalorder %s125, %s126
    %p140 = scmp.eq.s32.totalorder %s15, 1
    %p141 = por %p139, %p140
    %p143 = scmp.ne.s32.totalorder %s126, %s142
    %p144 = scmp.eq.s32.totalorder %s15, 0
    %p145 = por %p143, %p144
    %p146 = scmp.le.s32.totalorder 1, %s9
    %p147 = scmp.lt.s32.totalorder %s9, 3
    %p148 = pnand %p146, %p147
    %p149 = pneg %p148
    // Predicated region
    $region9: #{downsample_forward.1} parent=5 // pred_check
      _
    $region10: #{downsample_forward.1} parent=5 // pred_check_branch
      %151 = sbr.rel (%p148) target = $region12
    $region11: #{downsample_forward.1} parent=5 // pred_region
      %s152 = ssub.s32 %s9, 1
      // Predicated region
      $region13: #{downsample_forward.1} parent=11 // pred_check
        %p153 = pneg %p82
      $region14: #{downsample_forward.1} parent=11 // pred_check_branch
        %155 = sbr.rel (%p153) target = $region16
      $region15: #{downsample_forward.1} parent=11 // pred_region
        %p156 = scmp.lt.s32.totalorder %s21, 0
        %s157 = scalar_select %p156, %s21, 0
        %s158 = smul.addr %s157, 8
        %s159 = scalar_lea.vmem %s1, %s158
      $region16: #{downsample_forward.1} parent=11 // pred_fallthru
        _
      // Predicated region
      $region17: #{downsample_forward.1} parent=11 // pred_check
        %p160 = pneg %p108
      $region18: #{downsample_forward.1} parent=11 // pred_check_branch
        %162 = sbr.rel (%p160) target = $region20
      $region19: #{downsample_forward.1} parent=11 // pred_region
        %p163 = scmp.lt.s32.totalorder %s21, 0
        %s164 = scalar_select %p163, %s21, 0
        %s165 = scalar_lea.vmem %s2, %s164
      $region20: #{downsample_forward.1} parent=11 // pred_fallthru
        _
    $region12: #{downsample_forward.1} parent=5 // pred_fallthru
      _
    %p166 = scmp.lt.s32.totalorder %s9, 2
    // Predicated region
    $region21: #{downsample_forward.1} parent=5 // pred_check
      %p167 = pneg %p166
    $region22: #{downsample_forward.1} parent=5 // pred_check_branch
      %169 = sbr.rel (%p167) target = $region24
    $region23: #{downsample_forward.1} parent=5 // pred_region
      // Predicated region
      $region25: #{downsample_forward.1} parent=23 // pred_check
        %p170 = pneg %p50
      $region26: #{downsample_forward.1} parent=23 // pred_check_branch
        %172 = sbr.rel (%p170) target = $region28
      $region27: #{downsample_forward.1} parent=23 // pred_region
        %p173 = scmp.lt.s32.totalorder %s16, 1
        %s174 = scalar_select %p173, %s16, 1
        %p175 = scmp.lt.s32.totalorder %s17, 0
        %s176 = scalar_select %p175, %s17, 0
        %s177 = smul.addr %s176, 17
        %s178 = smul.addr %s174, 17
        %s179 = sadd.s32 %s177, %s178
        %s180 = smul.addr %s179, 8
        %s181 = scalar_lea.vmem %s0, %s180
      $region28: #{downsample_forward.1} parent=23 // pred_fallthru
        _
    $region24: #{downsample_forward.1} parent=5 // pred_fallthru
      _
    %p182 = scmp.le.s32.totalorder 1, %s9
    %p183 = scmp.lt.s32.totalorder %s9, 3
    %p184 = pnand %p182, %p183
    %p185 = pneg %p184
    // Predicated region
    $region29: #{downsample_forward.1} parent=5 // pred_check
      _
    $region30: #{downsample_forward.1} parent=5 // pred_check_branch
      %187 = sbr.rel (%p184) target = $region32
    $region31: #{downsample_forward.1} parent=5 // pred_region
      %s188 = ssub.s32 %s9, 1
      %p189 = scmp.lt.s32.totalorder %s19, 1
      %s190 = scalar_select %p189, %s19, 1
      %p191 = scmp.lt.s32.totalorder %s20, 0
      %s192 = scalar_select %p191, %s20, 0
      %s193 = smul.addr %s192, 17
      %s194 = smul.addr %s190, 17
      %s195 = sadd.s32 %s193, %s194
      %s196 = smul.addr %s195, 8
      %s197 = scalar_lea.vmem %s0, %s196
      %p198 = pneg %p56
      %p199 = pneg %p53
      %p200 = scmp.lt.s32.totalorder %s21, 0
      %s201 = scalar_select %p200, %s21, 0
      %s202 = smul.addr %s201, 8
      %s203 = scalar_lea.vmem %s1, %s202
      %p204 = pneg %p82
      %p205 = pneg %p79
      %p206 = scmp.lt.s32.totalorder %s21, 0
      %s207 = scalar_select %p206, %s21, 0
      %s208 = scalar_lea.vmem %s2, %s207
      %p209 = pneg %p108
      %p210 = pneg %p105
      %p211 = pneg %p138
      %p212 = pneg %p135
      %s213 = smul.u32 8, %s20
      %p214 = scmp.lt.s32.totalorder %s19, 1
      %s215 = scalar_select %p214, %s19, 1
      %p216 = scmp.lt.s32.totalorder %s213, 7
      %s217 = scalar_select %p216, %s213, 7
      %p218 = scmp.lt.s32.totalorder %s21, 0
      %s219 = scalar_select %p218, %s21, 0
      %s220 = sadd.s32 %s219, %s217
      %s221 = smul.addr %s215, 8
      %s222 = sadd.s32 %s220, %s221
      %s223 = smul.addr %s222, 8
      %s224 = scalar_lea.vmem %s3, %s223
      %p225 = scmp.lt.s32.totalorder %s19, 1
      %s226 = scalar_select %p225, %s19, 1
      %p227 = scmp.lt.s32.totalorder %s20, 0
      %s228 = scalar_select %p227, %s20, 0
      %s229 = smul.addr %s228, 17
      %s230 = smul.addr %s226, 17
      %s231 = sadd.s32 %s229, %s230
      %s232 = smul.addr %s231, 8
      %s233 = scalar_lea.vmem %s0, %s232
      %p234 = scmp.lt.s32.totalorder %s21, 0
      %s235 = scalar_select %p234, %s21, 0
      %s236 = smul.addr %s235, 8
      %s237 = scalar_lea.vmem %s1, %s236
      %p238 = scmp.lt.s32.totalorder %s21, 0
      %s239 = scalar_select %p238, %s21, 0
      %s240 = scalar_lea.vmem %s2, %s239
      %s241 = smul.u32 8, %s20
      %p242 = scmp.lt.s32.totalorder %s19, 1
      %s243 = scalar_select %p242, %s19, 1
      %p244 = scmp.lt.s32.totalorder %s241, 7
      %s245 = scalar_select %p244, %s241, 7
      %p246 = scmp.lt.s32.totalorder %s21, 0
      %s247 = scalar_select %p246, %s21, 0
      %s248 = sadd.s32 %s247, %s245
      %s249 = smul.addr %s243, 8
      %s250 = sadd.s32 %s248, %s249
      %s251 = smul.addr %s250, 8
      %s252 = scalar_lea.vmem %s3, %s251
      %s253 = smul.u32 8, %s20
      %v254 = vld [vmem:[%s240] sm:$0x1]
      %v255 = vld [vmem:[%s233] sm:$0xff]
      %v256 = vld [vmem:[%s233 + $0x8] sm:$0xff]
      %v257 = vld [vmem:[%s233 + $0x10] sm:$0xff]
      %v258 = vld [vmem:[%s233 + $0x18] sm:$0xff]
      %v259 = vld [vmem:[%s233 + $0x20] sm:$0xff]
      %v260 = vld [vmem:[%s233 + $0x28] sm:$0xff]
      %v261 = vld [vmem:[%s233 + $0x30] sm:$0xff]
      %v262 = vld [vmem:[%s233 + $0x38] sm:$0xff]
      %s263 = scalar_lea.vmem %s233, 72
      %v264 = vld [vmem:[%s263] sm:$0xff]
      %v265 = vld [vmem:[%s263 + $0x8] sm:$0xff]
      %v266 = vld [vmem:[%s263 + $0x10] sm:$0xff]
      %v267 = vld [vmem:[%s263 + $0x18] sm:$0xff]
      %v268 = vld [vmem:[%s263 + $0x20] sm:$0xff]
      %v269 = vld [vmem:[%s263 + $0x28] sm:$0xff]
      %v270 = vld [vmem:[%s263 + $0x30] sm:$0xff]
      %v271 = vld [vmem:[%s263 + $0x38] sm:$0xff]
      %s272 = scalar_lea.vmem %s233, 8
      %v273 = vld [vmem:[%s272] sm:$0xff]
      %v274 = vld [vmem:[%s272 + $0x8] sm:$0xff]
      %v275 = vld [vmem:[%s272 + $0x10] sm:$0xff]
      %v276 = vld [vmem:[%s272 + $0x18] sm:$0xff]
      %v277 = vld [vmem:[%s272 + $0x20] sm:$0xff]
      %v278 = vld [vmem:[%s272 + $0x28] sm:$0xff]
      %v279 = vld [vmem:[%s272 + $0x30] sm:$0xff]
      %v280 = vld [vmem:[%s272 + $0x38] sm:$0xff]
      %v282 = vperm.slane %v254, 0
      %v284 = vld [vmem:[%s237] sm:$0xff]
      %v285 = vld [vmem:[%s237 + $0x8] sm:$0xf]
      %vm286 = vcmask 97280
      %v288 = vsel %vm286, %v255, 0
      %v291 = vsel %vm286, %v256, 0
      %v294 = vsel %vm286, %v257, 0
      %v297 = vsel %vm286, %v258, 0
      %v300 = vsel %vm286, %v259, 0
      %v303 = vsel %vm286, %v260, 0
      %v306 = vsel %vm286, %v261, 0
      %v309 = vsel %vm286, %v262, 0
      %vm311 = vcmask 1043456
      %v313 = vsel %vm311, %v285, 0
      %315 = vmatpush.msra.mxu0 0.0
      %316 = vmatpush.msra.mxu0 0.0
      %317 = vmatpush.msra.mxu0 0.0
      %318 = vmatpush.msra.mxu0 0.0
      %319 = vmatpush.msra.mxu0 0.0
      %320 = vmatpush.msra.mxu0 0.0
      %321 = vmatpush.msra.mxu0 0.0
      %322 = vmatpush.msra.mxu0 0.0
      %323 = vmatpush.msra.mxu0 0.0
      %324 = vmatpush.msra.mxu0 0.0
      %325 = vmatpush.msra.mxu0 0.0
      %326 = vmatpush.msra.mxu0 0.0
      %327 = vmatpush.msra.mxu0 0.0
      %328 = vmatpush.msra.mxu0 0.0
      %329 = vmatpush.msra.mxu0 %v313
      %330 = vmatpush.msra.mxu0 %v284
      %331 = vmatmul.f32.gmra.mxu0 %v288
      %v332 = vpop.f32.mrf.mxu0
      %v333 = vadd.f32 0.0, %v332
      %334 = vmatmul.f32.gmra.mxu0 %v291
      %v335 = vpop.f32.mrf.mxu0
      %v336 = vadd.f32 0.0, %v335
      %337 = vmatmul.f32.gmra.mxu0 %v294
      %v338 = vpop.f32.mrf.mxu0
      %v339 = vadd.f32 0.0, %v338
      %340 = vmatmul.f32.gmra.mxu0 %v297
      %v341 = vpop.f32.mrf.mxu0
      %v342 = vadd.f32 0.0, %v341
      %343 = vmatmul.f32.gmra.mxu0 %v300
      %v344 = vpop.f32.mrf.mxu0
      %v345 = vadd.f32 0.0, %v344
      %346 = vmatmul.f32.gmra.mxu0 %v303
      %v347 = vpop.f32.mrf.mxu0
      %v348 = vadd.f32 0.0, %v347
      %349 = vmatmul.f32.gmra.mxu0 %v306
      %v350 = vpop.f32.mrf.mxu0
      %v351 = vadd.f32 0.0, %v350
      %352 = vmatmul.f32.gmra.mxu0 %v309
      %v353 = vpop.f32.mrf.mxu0
      %v354 = vadd.f32 0.0, %v353
      %355 = vdwg.mxu0
      %v356 = vadd.f32 %v282, %v333
      %v357 = vadd.f32 %v282, %v336
      %v358 = vadd.f32 %v282, %v339
      %v359 = vadd.f32 %v282, %v342
      %v360 = vadd.f32 %v282, %v345
      %v361 = vadd.f32 %v282, %v348
      %v362 = vadd.f32 %v282, %v351
      %v363 = vadd.f32 %v282, %v354
      %s364 = scalar_lea.vmem %s237, 16
      %v365 = vld [vmem:[%s364] sm:$0xff]
      %v366 = vld [vmem:[%s364 + $0x8] sm:$0xf]
      %v368 = vsel %vm286, %v264, 0
      %v371 = vsel %vm286, %v265, 0
      %v374 = vsel %vm286, %v266, 0
      %v377 = vsel %vm286, %v267, 0
      %v380 = vsel %vm286, %v268, 0
      %v383 = vsel %vm286, %v269, 0
      %v386 = vsel %vm286, %v270, 0
      %v389 = vsel %vm286, %v271, 0
      %v392 = vsel %vm311, %v366, 0
      %394 = vmatpush.msra.mxu0 0.0
      %395 = vmatpush.msra.mxu0 0.0
      %396 = vmatpush.msra.mxu0 0.0
      %397 = vmatpush.msra.mxu0 0.0
      %398 = vmatpush.msra.mxu0 0.0
      %399 = vmatpush.msra.mxu0 0.0
      %400 = vmatpush.msra.mxu0 0.0
      %401 = vmatpush.msra.mxu0 0.0
      %402 = vmatpush.msra.mxu0 0.0
      %403 = vmatpush.msra.mxu0 0.0
      %404 = vmatpush.msra.mxu0 0.0
      %405 = vmatpush.msra.mxu0 0.0
      %406 = vmatpush.msra.mxu0 0.0
      %407 = vmatpush.msra.mxu0 0.0
      %408 = vmatpush.msra.mxu0 %v392
      %409 = vmatpush.msra.mxu0 %v365
      %410 = vmatmul.f32.gmra.mxu0 %v368
      %v411 = vpop.f32.mrf.mxu0
      %v412 = vadd.f32 0.0, %v411
      %413 = vmatmul.f32.gmra.mxu0 %v371
      %v414 = vpop.f32.mrf.mxu0
      %v415 = vadd.f32 0.0, %v414
      %416 = vmatmul.f32.gmra.mxu0 %v374
      %v417 = vpop.f32.mrf.mxu0
      %v418 = vadd.f32 0.0, %v417
      %419 = vmatmul.f32.gmra.mxu0 %v377
      %v420 = vpop.f32.mrf.mxu0
      %v421 = vadd.f32 0.0, %v420
      %422 = vmatmul.f32.gmra.mxu0 %v380
      %v423 = vpop.f32.mrf.mxu0
      %v424 = vadd.f32 0.0, %v423
      %425 = vmatmul.f32.gmra.mxu0 %v383
      %v426 = vpop.f32.mrf.mxu0
      %v427 = vadd.f32 0.0, %v426
      %428 = vmatmul.f32.gmra.mxu0 %v386
      %v429 = vpop.f32.mrf.mxu0
      %v430 = vadd.f32 0.0, %v429
      %431 = vmatmul.f32.gmra.mxu0 %v389
      %v432 = vpop.f32.mrf.mxu0
      %v433 = vadd.f32 0.0, %v432
      %434 = vdwg.mxu0
      %v435 = vadd.f32 %v356, %v412
      %v436 = vadd.f32 %v357, %v415
      %v437 = vadd.f32 %v358, %v418
      %v438 = vadd.f32 %v359, %v421
      %v439 = vadd.f32 %v360, %v424
      %v440 = vadd.f32 %v361, %v427
      %v441 = vadd.f32 %v362, %v430
      %v442 = vadd.f32 %v363, %v433
      %s443 = scalar_lea.vmem %s237, 32
      %v444 = vld [vmem:[%s443] sm:$0xff]
      %v445 = vld [vmem:[%s443 + $0x8] sm:$0xf]
      %v447 = vsel %vm286, %v273, 0
      %v450 = vsel %vm286, %v274, 0
      %v453 = vsel %vm286, %v275, 0
      %v456 = vsel %vm286, %v276, 0
      %v459 = vsel %vm286, %v277, 0
      %v462 = vsel %vm286, %v278, 0
      %v465 = vsel %vm286, %v279, 0
      %v468 = vsel %vm286, %v280, 0
      %v471 = vsel %vm311, %v445, 0
      %473 = vmatpush.msra.mxu0 0.0
      %474 = vmatpush.msra.mxu0 0.0
      %475 = vmatpush.msra.mxu0 0.0
      %476 = vmatpush.msra.mxu0 0.0
      %477 = vmatpush.msra.mxu0 0.0
      %478 = vmatpush.msra.mxu0 0.0
      %479 = vmatpush.msra.mxu0 0.0
      %480 = vmatpush.msra.mxu0 0.0
      %481 = vmatpush.msra.mxu0 0.0
      %482 = vmatpush.msra.mxu0 0.0
      %483 = vmatpush.msra.mxu0 0.0
      %484 = vmatpush.msra.mxu0 0.0
      %485 = vmatpush.msra.mxu0 0.0
      %486 = vmatpush.msra.mxu0 0.0
      %487 = vmatpush.msra.mxu0 %v471
      %488 = vmatpush.msra.mxu0 %v444
      %489 = vmatmul.f32.gmra.mxu0 %v447
      %v490 = vpop.f32.mrf.mxu0
      %v491 = vadd.f32 0.0, %v490
      %492 = vmatmul.f32.gmra.mxu0 %v450
      %v493 = vpop.f32.mrf.mxu0
      %v494 = vadd.f32 0.0, %v493
      %495 = vmatmul.f32.gmra.mxu0 %v453
      %v496 = vpop.f32.mrf.mxu0
      %v497 = vadd.f32 0.0, %v496
      %498 = vmatmul.f32.gmra.mxu0 %v456
      %v499 = vpop.f32.mrf.mxu0
      %v500 = vadd.f32 0.0, %v499
      %501 = vmatmul.f32.gmra.mxu0 %v459
      %v502 = vpop.f32.mrf.mxu0
      %v503 = vadd.f32 0.0, %v502
      %504 = vmatmul.f32.gmra.mxu0 %v462
      %v505 = vpop.f32.mrf.mxu0
      %v506 = vadd.f32 0.0, %v505
      %507 = vmatmul.f32.gmra.mxu0 %v465
      %v508 = vpop.f32.mrf.mxu0
      %v509 = vadd.f32 0.0, %v508
      %510 = vmatmul.f32.gmra.mxu0 %v468
      %v511 = vpop.f32.mrf.mxu0
      %v512 = vadd.f32 0.0, %v511
      %513 = vdwg.mxu0
      %v514 = vadd.f32 %v435, %v491
      %v515 = vadd.f32 %v436, %v494
      %v516 = vadd.f32 %v437, %v497
      %v517 = vadd.f32 %v438, %v500
      %v518 = vadd.f32 %v439, %v503
      %v519 = vadd.f32 %v440, %v506
      %v520 = vadd.f32 %v441, %v509
      %v521 = vadd.f32 %v442, %v512
      %522 = vst [vmem:[%s252] sm:$0xff] %v514
      %523 = vst [vmem:[%s252 + $0x8] sm:$0xff] %v515
      %524 = vst [vmem:[%s252 + $0x10] sm:$0xff] %v516
      %525 = vst [vmem:[%s252 + $0x18] sm:$0xff] %v517
      %526 = vst [vmem:[%s252 + $0x20] sm:$0xff] %v518
      %527 = vst [vmem:[%s252 + $0x28] sm:$0xff] %v519
      %528 = vst [vmem:[%s252 + $0x30] sm:$0xff] %v520
      %529 = vst [vmem:[%s252 + $0x38] sm:$0xff] %v521
      %s530 = smul.u32 8, %s20
      %p531 = scmp.lt.s32.totalorder %s19, 1
      %s532 = scalar_select %p531, %s19, 1
      %p533 = scmp.lt.s32.totalorder %s530, 7
      %s534 = scalar_select %p533, %s530, 7
      %p535 = scmp.lt.s32.totalorder %s21, 0
      %s536 = scalar_select %p535, %s21, 0
      %s537 = sadd.s32 %s536, %s534
      %s538 = smul.addr %s532, 8
      %s539 = sadd.s32 %s537, %s538
      %s540 = smul.addr %s539, 8
      %s541 = scalar_lea.vmem %s3, %s540
      // Predicated region
      $region33: #{downsample_forward.1} parent=31 // pred_check
        %p542 = pneg %p135
      $region34: #{downsample_forward.1} parent=31 // pred_check_branch
        %544 = sbr.rel (%p542) target = $region36
      $region35: #{downsample_forward.1} parent=31 // pred_region
        %s545 = smul.u32 8, %s20
      $region36: #{downsample_forward.1} parent=31 // pred_fallthru
        _
    $region32: #{downsample_forward.1} parent=5 // pred_fallthru
      _
    %p546 = scmp.le.s32.totalorder 2, %s9
    // Predicated region
    $region37: #{downsample_forward.1} parent=5 // pred_check
      %p547 = pneg %p546
    $region38: #{downsample_forward.1} parent=5 // pred_check_branch
      %549 = sbr.rel (%p547) target = $region40
    $region39: #{downsample_forward.1} parent=5 // pred_region
      %s550 = ssub.s32 %s9, 2
      // Predicated region
      $region41: #{downsample_forward.1} parent=39 // pred_check
        %p551 = pneg %p141
      $region42: #{downsample_forward.1} parent=39 // pred_check_branch
        %553 = sbr.rel (%p551) target = $region44
      $region43: #{downsample_forward.1} parent=39 // pred_region
        %s554 = smul.u32 8, %s23
        %p555 = scmp.lt.s32.totalorder %s22, 1
        %s556 = scalar_select %p555, %s22, 1
        %p557 = scmp.lt.s32.totalorder %s554, 7
        %s558 = scalar_select %p557, %s554, 7
        %p559 = scmp.lt.s32.totalorder %s24, 0
        %s560 = scalar_select %p559, %s24, 0
        %s561 = sadd.s32 %s560, %s558
        %s562 = smul.addr %s556, 8
        %s563 = sadd.s32 %s561, %s562
        %s564 = smul.addr %s563, 8
        %s565 = scalar_lea.vmem %s3, %s564
      $region44: #{downsample_forward.1} parent=39 // pred_fallthru
        _
    $region40: #{downsample_forward.1} parent=5 // pred_fallthru
      _
  $region6: #{downsample_forward.1} parent=0 // loop_footer
    %s13 = sadd.s32 1, %s9
  $region7: #{downsample_forward.1} parent=0 // loop_footer_branch
    %8 = sbr.rel target = $region3
  $region8: #{downsample_forward.1} parent=0 // loop_exit
    _

</llo_original>
